<compile_context>
chip_gen: v7x
topology: tpu7x:2x2x1
jax: 0.10.0
libtpu: 0.0.40
codegen_flags: <defaults>
</compile_context>

<pallas_src>
import math
import functools

import jax
import jax.numpy as jnp
from jax.experimental import pallas as pl
from jax.experimental.pallas import tpu as pltpu


def make_pos_embedding(emb_size: int, maxlen: int,
                       dtype=jnp.float32) -> jnp.ndarray:
    """Deterministic sin/cos table, same math as the PyTorch __init__.

    Pre-cast to the model dtype once at init so the forward wrapper does no
    per-call slice/convert work.
    """
    den = jnp.exp(
        -jnp.arange(0, emb_size, 2, dtype=jnp.float32)
        * (math.log(10000.0) / emb_size)
    )
    pos = jnp.arange(0, maxlen, dtype=jnp.float32).reshape(maxlen, 1)
    pe = jnp.zeros((maxlen, emb_size), jnp.float32)
    pe = pe.at[:, 0::2].set(jnp.sin(pos * den))
    pe = pe.at[:, 1::2].set(jnp.cos(pos * den))
    # PyTorch keeps (maxlen, 1, emb_size); we keep (maxlen, emb_size) and
    # broadcast over batch inside the kernel (identical numerics).
    return pe.astype(dtype)


def _posenc_kernel(seed_ref, x_ref, pos_ref, o_ref, *,
                   batch, emb, keep_threshold, inv_keep, apply_dropout):
    # x_ref/o_ref: (TS, B*E) lane-dense slabs; pos_ref: (TS, E).
    pos = pos_ref[...]                     # load once, reused for every batch

    if apply_dropout:
        # Two independent seed words -> no additive aliasing across
        # (seed, tile) pairs; every grid step gets its own stream.
        pltpu.prng_seed(seed_ref[0], pl.program_id(0))

    for b in range(batch):                 # static unroll; B is small
        sl = slice(b * emb, (b + 1) * emb)
        y = x_ref[:, sl] + pos             # pure VPU add, no lane movement
        if apply_dropout:
            bits = pltpu.bitcast(pltpu.prng_random_bits(y.shape), jnp.uint32)
            keep = bits >= jnp.uint32(keep_threshold)   # P(keep) = 1 - p
            # Scale in f32 to avoid a systematic bf16 rounding of 1/(1-p).
            yf = jnp.where(keep,
                           y.astype(jnp.float32) * inv_keep,
                           jnp.zeros((), jnp.float32))
            o_ref[:, sl] = yf.astype(o_ref.dtype)
        else:
            o_ref[:, sl] = y.astype(o_ref.dtype)


def _cdiv(a: int, b: int) -> int:
    return (a + b - 1) // b


def _round_up(v: int, m: int) -> int:
    return (v + m - 1) // m * m


def positional_encoding(token_embedding: jnp.ndarray,
                        pos_table: jnp.ndarray,
                        *,
                        dropout_p: float = 0.1,
                        training: bool = False,
                        seed: int = 0,
                        target_block_bytes: int | None = None) -> jnp.ndarray:
    """token_embedding: (S, B, E); pos_table: (maxlen, E), maxlen >= S."""
    S, B, E = token_embedding.shape
    dtype = token_embedding.dtype
    itemsize = jnp.dtype(dtype).itemsize

    # Lane-dense 2-D view of x / out.  pos_table should already be in the
    # model dtype (make_pos_embedding(dtype=...)); cast only if it is not.
    x2d = token_embedding.reshape(S, B * E)
    if pos_table.dtype != dtype:
        pos_table = pos_table.astype(dtype)
    pos_itemsize = jnp.dtype(pos_table.dtype).itemsize
    seed_arr = jnp.array([seed], dtype=jnp.int32)

    # ---- generation-aware budgets ------------------------------------------
    try:
        vmem_cap = int(pltpu.get_tpu_info().vmem_capacity_bytes)
    except Exception:
        vmem_cap = 64 * 1024 * 1024                    # conservative (v7x-like)
    # Leave headroom for pos double-buffers, semaphores, internal scratch.
    cap = min(96 * 1024 * 1024, max(16 * 1024 * 1024, vmem_cap - 24 * 1024 * 1024))
    if target_block_bytes is None:
        target_block_bytes = (8 * 1024 * 1024 if vmem_cap >= 96 * 1024 * 1024
                              else 4 * 1024 * 1024)

    # ---- tile size over S ----------------------------------------------------
    row_bytes = B * E * itemsize
    pos_row_bytes = E * pos_itemsize
    total_bytes = S * row_bytes

    def needed_bytes(t):                  # double-buffered x + out + pos
        return 2 * (2 * t * row_bytes + t * pos_row_bytes)

    ts = max(8, (target_block_bytes // max(row_bytes, 1)) // 8 * 8)
    if total_bytes > (1 << 20):
        # keep at least 2 S-blocks so the parallel axis spans both v7x cores
        ts = min(ts, _round_up(_cdiv(S, 2), 8))
    if ts >= S:
        ts = S
    while ts > 8 and needed_bytes(ts) > cap:
        ts = max(8, ((ts // 2) // 8) * 8)

    nblk = _cdiv(S, ts)
    if nblk > 1 and nblk % 2 == 1:        # prefer an even block count (v7x)
        ts_alt = _round_up(_cdiv(S, nblk + 1), 8)
        if ts_alt >= 8 and _cdiv(S, ts_alt) % 2 == 0 and needed_bytes(ts_alt) <= cap:
            ts = ts_alt
    grid = (_cdiv(S, ts),)

    vmem_limit = int(min(max(needed_bytes(ts) * 2, 16 * 1024 * 1024), cap))

    # ---- dropout constants ---------------------------------------------------
    apply_dropout = bool(training) and dropout_p > 0.0
    keep_threshold = min(int(round(dropout_p * (2 ** 32))), 2 ** 32 - 1)
    inv_keep = 1.0 / (1.0 - dropout_p) if dropout_p < 1.0 else 0.0

    kernel = functools.partial(
        _posenc_kernel,
        batch=B, emb=E,
        keep_threshold=keep_threshold,
        inv_keep=inv_keep,
        apply_dropout=apply_dropout,
    )

    cost = pl.CostEstimate(
        flops=S * B * E,
        transcendentals=0,
        bytes_accessed=2 * S * B * E * itemsize + S * E * pos_itemsize,
    )

    out2d = pl.pallas_call(
        kernel,
        out_shape=jax.ShapeDtypeStruct((S, B * E), dtype),
        grid_spec=pltpu.PrefetchScalarGridSpec(
            num_scalar_prefetch=1,                     # dropout seed in SMEM
            grid=grid,
            in_specs=[
                pl.BlockSpec((ts, B * E), lambda i, sref: (i, 0)),
                pl.BlockSpec((ts, E), lambda i, sref: (i, 0)),
            ],
            out_specs=pl.BlockSpec((ts, B * E), lambda i, sref: (i, 0)),
        ),
        input_output_aliases={1: 0},                   # alias x2d -> out
        cost_estimate=cost,
        compiler_params=pltpu.CompilerParams(
            dimension_semantics=("parallel",),         # shard S-tiles across TCs
            vmem_limit_bytes=vmem_limit,
        ),
    )(seed_arr, x2d, pos_table)

    return out2d.reshape(S, B, E)


if __name__ == "__main__":
    # ---- small test shape (single-block path) --------------------------------
    S, B, E = 8, 2, 32          # seq_len, batch, emb_size
    MAXLEN = 64

    key = jax.random.PRNGKey(0)
    x = jax.random.normal(key, (S, B, E), dtype=jnp.float32)
    pos_table = make_pos_embedding(E, MAXLEN)
    ref = x + pos_table[:S][:, None, :]          # reference BEFORE the call
                                                 # (output aliases the input view)

    out = positional_encoding(x, pos_table, dropout_p=0.1, training=False)
    out = jax.block_until_ready(out)
    assert out.shape == (S, B, E)
    assert jnp.allclose(out, ref, atol=1e-6), "eval-mode mismatch vs reference"

    # ---- multi-tile path (force grid > 1 with a tiny block budget) ------------
    S2, B2, E2 = 64, 2, 128
    x2 = jax.random.normal(jax.random.PRNGKey(1), (S2, B2, E2), dtype=jnp.float32)
    pos_table2 = make_pos_embedding(E2, 128)
    ref2 = x2 + pos_table2[:S2][:, None, :]
    out2 = positional_encoding(x2, pos_table2, dropout_p=0.1, training=False,
                               target_block_bytes=32 * 1024)    # -> 2 S-tiles
    out2 = jax.block_until_ready(out2)
    assert jnp.allclose(out2, ref2, atol=1e-6), "tiled eval-mode mismatch"

    # ---- training path: TPU only (pltpu.prng_* has no CPU/interpret lowering)
    if jax.devices()[0].platform == "tpu":
        p = 0.1
        out_tr = positional_encoding(x, pos_table, dropout_p=p, training=True,
                                     seed=123)
        out_tr = jax.block_until_ready(out_tr)
        scaled = ref / (1.0 - p)
        ok = jnp.isclose(out_tr, 0.0, atol=1e-6) | jnp.isclose(out_tr, scaled,
                                                               atol=1e-5)
        assert bool(jnp.all(ok)), "dropout output is not {0, ref/(1-p)}"
        # TODO(synk): dropout RNG stream differs from torch's (hardware PRNG);
        # distribution and scaling match, exact mask bits do not.

    print("KERNEL_OK")
</pallas_src>

<mosaic_0001>
module attributes {stable_mosaic.version = 11 : i64} {
  func.func @_posenc_kernel(%arg0: i32, %arg1: memref<1xi32, #tpu.memory_space<smem>>, %arg2: memref<8x64xf32, #tpu.memory_space<vmem>>, %arg3: memref<8x32xf32, #tpu.memory_space<vmem>>, %arg4: memref<8x64xf32, #tpu.memory_space<vmem>>) attributes {dimension_semantics = [#tpu.dimension_semantics<parallel>], iteration_bounds = array<i64: 1>, scalar_prefetch = 1 : i64, scratch_operands = 0 : i64, tpu.core_type = #tpu.core_type<tc>, window_params = [{transform_indices = @transform_0, window_bounds = array<i64: 8, 64>}, {transform_indices = @transform_1, window_bounds = array<i64: 8, 32>}, {transform_indices = @transform_2, window_bounds = array<i64: 8, 64>}]} {
    %c0 = arith.constant 0 : index
    %c0_0 = arith.constant 0 : index
    %0 = vector.load %arg3[%c0, %c0_0] : memref<8x32xf32, #tpu.memory_space<vmem>>, vector<8x32xf32>
    %c0_1 = arith.constant 0 : index
    %c0_2 = arith.constant 0 : index
    %1 = vector.load %arg2[%c0_1, %c0_2] : memref<8x64xf32, #tpu.memory_space<vmem>>, vector<8x32xf32>
    %2 = arith.addf %1, %0 : vector<8x32xf32>
    %c0_3 = arith.constant 0 : index
    %c0_4 = arith.constant 0 : index
    %3 = vector.load %arg4[%c0_3, %c0_4] : memref<8x64xf32, #tpu.memory_space<vmem>>, vector<8x32xf32>
    tpu.vector_store %arg4[%c0_3, %c0_4], %2 {strides = array<i32>} : memref<8x64xf32, #tpu.memory_space<vmem>>, vector<8x32xf32>,
    %c0_5 = arith.constant 0 : index
    %c32 = arith.constant 32 : index
    %4 = vector.load %arg2[%c0_5, %c32] : memref<8x64xf32, #tpu.memory_space<vmem>>, vector<8x32xf32>
    %5 = arith.addf %4, %0 : vector<8x32xf32>
    %c0_6 = arith.constant 0 : index
    %c32_7 = arith.constant 32 : index
    %6 = vector.load %arg4[%c0_6, %c32_7] : memref<8x64xf32, #tpu.memory_space<vmem>>, vector<8x32xf32>
    tpu.vector_store %arg4[%c0_6, %c32_7], %5 {strides = array<i32>} : memref<8x64xf32, #tpu.memory_space<vmem>>, vector<8x32xf32>,
    return
  }
  func.func @transform_0(%arg0: i32, %arg1: memref<1xi32, #tpu.memory_space<smem>>) -> (i32, i32) {
    %c0_i32 = arith.constant 0 : i32
    %c0_i32_0 = arith.constant 0 : i32
    return %arg0, %c0_i32 : i32, i32
  }
  func.func @transform_1(%arg0: i32, %arg1: memref<1xi32, #tpu.memory_space<smem>>) -> (i32, i32) {
    %c0_i32 = arith.constant 0 : i32
    %c0_i32_0 = arith.constant 0 : i32
    return %arg0, %c0_i32 : i32, i32
  }
  func.func @transform_2(%arg0: i32, %arg1: memref<1xi32, #tpu.memory_space<smem>>) -> (i32, i32) {
    %c0_i32 = arith.constant 0 : i32
    %c0_i32_0 = arith.constant 0 : i32
    return %arg0, %c0_i32 : i32, i32
  }
}

</mosaic_0001>

<llo_original>
// kernel: tpu_custom_call.1
$region0: #{tpu_custom_call.1}
  #allocation0 [shape = 'u32[]', space=smem, size = 0x4, offset = 0x4, fixed_abs, tag = 'smem constant byte address 0x4 - core index']
  #allocation1 [shape = 'u32[144,128]{1,0:T(1,128)}', space=vmem, size = 0x12000, scoped, tag = 'internal scratch']
  #allocation2 [shape = 's32[1]{0}', space=sflag, size = 0x4, scoped, tag = 'scoped memory for tpu_custom_call.1']
  #allocation3 [shape = 's32[1]{0:T(128)S(6)}', space=smem, size = 0x200, scoped, tag = 'prefetched SMEM operand 0']
  %s0 = inlined_call_operand.<no memory space> [shape: s32[1], index: 0, kind: input, shape index: {}]
  %s1 = inlined_call_operand.hbm [shape: f32[8,64], index: 1, kind: input, shape index: {}, may-alias: {1,3}]
  %s2 = inlined_call_operand.vmem [shape: f32[64,32], index: 2, kind: input, shape index: {}]
  %s3 = inlined_call_operand.hbm [shape: f32[8,64], index: 3, kind: output, shape index: {}, may-alias: {1,3}]
  %s4 = sld [smem:[#allocation0]]
  $region22: #{tpu_custom_call.1} parent=0
    _
  %s6 = ssub.s32 1, %s4
  %s7 = scalar_select 0, %s6, %s4
  %8 = sst [smem:[#allocation3]] %s0
  $region1: #{tpu_custom_call.1} parent=0
    #allocation4 [shape = 'u8[4096]{0}', space=vmem, size = 0x1000, scoped, tag = 'input window, operand 1, single buffered']
    #allocation5 [shape = 's32[1]{0}', space=sflag, size = 0x4, scoped, tag = 'scoped memory for tpu_custom_call.1']
    #allocation6 [shape = 's32[1]{0}', space=sflag, size = 0x4, scoped, tag = 'scoped memory for tpu_custom_call.1']
    #allocation7 [shape = 'u8[4096]{0}', space=vmem, size = 0x1000, scoped, tag = 'output window, operand 0, single buffered']
    %9 = vsyncpa [#allocation5], 0
    %10 = vsyncpa [#allocation6], 0
    // Predicated region
    $region2: #{tpu_custom_call.1} parent=1 // pred_check
      _
    $region3: #{tpu_custom_call.1} parent=1 // pred_check_branch
      %12 = sbr.rel (0) target = $region5
    $region4: #{tpu_custom_call.1} parent=1 // pred_region
      %s14 = ssub.s32 128, 128
      %15 = vsyncadd [#allocation5], %s14
      %s17 = sshll.u32 [#allocation4], 4
      %s18 = int_to_ptr.vmem [resolvable:$true] %s17
      %20 = dma.hbm_to_vmem [thread:$0]  %s1, 128, %s18, [#allocation5]
    $region5: #{tpu_custom_call.1} parent=1 // pred_fallthru
      _
    // Predicated region
    $region6: #{tpu_custom_call.1} parent=1 // pred_check
      _
    $region7: #{tpu_custom_call.1} parent=1 // pred_check_branch
      %22 = sbr.rel (0) target = $region9
    $region8: #{tpu_custom_call.1} parent=1 // pred_region
      _
    $region9: #{tpu_custom_call.1} parent=1 // pred_fallthru
      _
    // Predicated region
    $region10: #{tpu_custom_call.1} parent=1 // pred_check
      _
    $region11: #{tpu_custom_call.1} parent=1 // pred_check_branch
      %24 = sbr.rel (0) target = $region13
    $region12: #{tpu_custom_call.1} parent=1 // pred_region
      %25 = dma.done [#allocation5], 128
    $region13: #{tpu_custom_call.1} parent=1 // pred_fallthru
      _
    %v26 = vld [vmem:[%s2] sm:$0xff]
    %v27 = vld [vmem:[#allocation4] sm:$0xff]
    %v28 = vadd.f32 %v27, %v26
    %vm29 = vcmask 261120
    %30 = vst.msk [vmem:[#allocation7] sm:$0xff] %vm29, %v28
    %v31 = vld [vmem:[#allocation4] sm:$0xff]
    %33 = vrot.lane.b32.xlu0 %v26, 32
    %v34 = vpop.permute.xlu0 %33
    %v36 = vadd.f32 %v31, %v34
    %vm37 = vcmask 523520
    %38 = vst.msk [vmem:[#allocation7] sm:$0xff] %vm37, %v36
    // Predicated region
    $region14: #{tpu_custom_call.1} parent=1 // pred_check
      _
    $region15: #{tpu_custom_call.1} parent=1 // pred_check_branch
      %40 = sbr.rel (0) target = $region17
    $region16: #{tpu_custom_call.1} parent=1 // pred_region
      %s42 = ssub.s32 128, 128
      %43 = vsyncadd [#allocation6], %s42
      %s45 = sshll.u32 [#allocation7], 4
      %s46 = int_to_ptr.vmem [resolvable:$true] %s45
      %48 = dma.vmem_to_hbm [thread:$0]  %s46, 128, %s3, [#allocation6]
    $region17: #{tpu_custom_call.1} parent=1 // pred_fallthru
      _
    // Predicated region
    $region18: #{tpu_custom_call.1} parent=1 // pred_check
      _
    $region19: #{tpu_custom_call.1} parent=1 // pred_check_branch
      %50 = sbr.rel (0) target = $region21
    $region20: #{tpu_custom_call.1} parent=1 // pred_region
      %51 = dma.done [#allocation6], 128
    $region21: #{tpu_custom_call.1} parent=1 // pred_fallthru
      _
    %52 = vsyncpa [#allocation5], 1
    %53 = vsyncpa [#allocation6], 1

</llo_original>
